<compile_context>
chip_gen: v5e
topology: v5e:2x2
jax: 0.10.0
libtpu: 0.0.40
codegen_flags: <defaults>
</compile_context>

<pallas_src>
import functools

import numpy as np
import jax
import jax.numpy as jnp
from jax.experimental import pallas as pl
from jax.experimental.pallas import tpu as pltpu

# ---- synthetic stand-ins for the `constants` module ------------------------
WORD_EMBED_DIM = 32
NUM_USERS = 20
NUM_SUBREDDITS = 10

LANE = 128      # TPU lane width; padded feature dims are multiples of this
SUBLANE = 8     # TPU sublane width; all slab row offsets are multiples of this


def _round_up(x, m):
    return ((x + m - 1) // m) * m


# ---- host-side parameter packing (one lane-padded bf16 slab, one DMA) -------
def pack_mlp_params(user_table, subreddit_table, weights, biases,
                    n_user_tok, n_sub_tok, param_dtype=jnp.bfloat16):
    """Pack ONE stacked gather table + all Linear weights/biases into a single
    zero-padded (rows, lane) slab, plus a static layout dict of row offsets.

    Stacked table: token t's embedding table copy occupies its own row block and
    its values live in lanes [t*D, (t+1)*D), so one one-hot matmul yields the
    concatenated per-batch embedding directly."""
    D = int(user_table.shape[1])
    n_tok = n_user_tok + n_sub_tok
    n_layers = len(weights)
    dims = [int(w.shape[1]) for w in weights]                  # real out dims
    assert int(weights[0].shape[0]) == n_tok * D, "layer-0 in_dim must be n_tok * WORD_EMBED_DIM"
    lane = _round_up(max(dims + [n_tok * D]), LANE)            # 128 here (v5e-native)

    tables = ([np.asarray(user_table, np.float32)] * n_user_tok
              + [np.asarray(subreddit_table, np.float32)] * n_sub_tok)
    tok_rows = [_round_up(int(t.shape[0]), SUBLANE) for t in tables]
    tok_row_offs = [0]
    for rws in tok_rows[:-1]:
        tok_row_offs.append(tok_row_offs[-1] + rws)
    tab_rows = sum(tok_rows)

    # --- row offsets (all multiples of SUBLANE) ---
    r = 0
    tab_off = r; r += tab_rows
    w_offs = []
    for _ in range(n_layers):
        w_offs.append(r); r += lane
    b_offs = []
    for _ in range(n_layers):
        b_offs.append(r); r += SUBLANE
    total_rows = _round_up(r, SUBLANE)

    slab = np.zeros((total_rows, lane), np.float32)
    for t, tab in enumerate(tables):                           # stacked gather table
        r0 = tab_off + tok_row_offs[t]
        slab[r0:r0 + tab.shape[0], t * D:(t + 1) * D] = tab
    for i in range(n_layers):                                  # weights (un-split) + biases
        W = np.asarray(weights[i], np.float32)
        slab[w_offs[i]:w_offs[i] + W.shape[0], :dims[i]] = W
        slab[b_offs[i], :dims[i]] = np.asarray(biases[i], np.float32).reshape(-1)

    layout = dict(
        lane=lane, n_layers=n_layers, n_tok=n_tok,
        tab_off=tab_off, tab_rows=tab_rows,
        tok_row_offs=tuple(tok_row_offs),
        w_offs=tuple(w_offs), b_offs=tuple(b_offs),
        output_dim=dims[-1],
        idx_lanes=_round_up(n_tok, LANE),
    )
    return jnp.asarray(slab).astype(param_dtype), layout


# ---- fused Pallas kernel: one gather matmul + Linear/ReLU stack --------------
def mlp_social_kernel(idx_ref, slab_ref, out_ref, *, layout):
    f32 = jnp.float32
    wdt = slab_ref.dtype                                       # bf16 matmul operands
    B = out_ref.shape[0]
    lane = layout["lane"]
    n_layers = layout["n_layers"]
    n_tok = layout["n_tok"]
    tab_rows = layout["tab_rows"]

    idx = idx_ref[...]                                         # (B, idx_lanes) int32, global rows

    # ---- fused gather: ONE block one-hot @ ONE stacked table (MXU) ----------
    # Each token's one-hot hits a disjoint row block, so the sum is the
    # concatenated (B, n_tok*D) embedding, lane-padded to (B, lane).
    iota = jax.lax.broadcasted_iota(jnp.int32, (B, tab_rows), 1)
    onehot = (iota == idx[:, 0:1]).astype(f32)
    for t in range(1, n_tok):
        onehot = onehot + (iota == idx[:, t:t + 1]).astype(f32)
    table = slab_ref[pl.ds(layout["tab_off"], tab_rows), :]    # (tab_rows, lane)
    h = jnp.dot(onehot.astype(wdt), table, preferred_element_type=f32)   # (B, lane) f32, exact

    # ---- Linear / ReLU stack: activations stay f32; only matmul operands bf16
    for i in range(n_layers):
        w = slab_ref[pl.ds(layout["w_offs"][i], lane), :]      # (lane, lane)
        b = slab_ref[pl.ds(layout["b_offs"][i], 1), :].astype(f32)
        h = jnp.dot(h.astype(wdt), w, preferred_element_type=f32) + b
        if i < n_layers - 1:
            h = jnp.maximum(h, 0.0)

    out_ref[...] = h.astype(out_ref.dtype)                     # (B, lane) lane-dense store


def mlp_social_pallas(idx, slab, layout, *, batch_tile=512):
    B, idx_lanes = idx.shape
    lane = layout["lane"]
    kern = functools.partial(mlp_social_kernel, layout=layout)
    out_shape = jax.ShapeDtypeStruct((B, lane), jnp.float32)

    if B >= 2 * batch_tile and B % batch_tile == 0:
        # Large batch: tile batch as a "parallel" grid axis (both v7x TCs get
        # work); the slab index_map returns block (0,0) every step -> resident.
        return pl.pallas_call(
            kern,
            out_shape=out_shape,
            grid_spec=pltpu.PrefetchScalarGridSpec(
                num_scalar_prefetch=0,
                grid=(B // batch_tile,),
                in_specs=[
                    pl.BlockSpec((batch_tile, idx_lanes), lambda i: (i, 0)),
                    pl.BlockSpec(slab.shape, lambda i: (0, 0)),
                ],
                out_specs=pl.BlockSpec((batch_tile, lane), lambda i: (i, 0)),
            ),
            compiler_params=pltpu.CompilerParams(
                dimension_semantics=("parallel",)),
        )(idx, slab)

    # Small batch: single invocation, whole-array VMEM blocks, no pipeline.
    return pl.pallas_call(
        kern,
        out_shape=out_shape,
        in_specs=[pl.BlockSpec(memory_space=pltpu.MemorySpace.VMEM)] * 2,
        out_specs=pl.BlockSpec(memory_space=pltpu.MemorySpace.VMEM),
    )(idx, slab)


# ---- jitted forward (matches the PyTorch forward with prepend_social=True) --
def make_forward(slab, layout):
    n_tok = layout["n_tok"]
    idx_lanes = layout["idx_lanes"]
    out_dim = layout["output_dim"]
    tok_row_offs = layout["tok_row_offs"]

    @jax.jit
    def fwd(text_inputs, user_inputs, subreddit_inputs, metafeats, lengths):
        del text_inputs, metafeats, lengths        # unused by the reference forward
        u = jnp.transpose(user_inputs).astype(jnp.int32)        # (B, Lu)
        s = jnp.transpose(subreddit_inputs).astype(jnp.int32)   # (B, Ls)
        idx = jnp.concatenate([u, s], axis=1)                   # (B, n_tok) local indices
        idx = idx + jnp.asarray(tok_row_offs, jnp.int32)[None, :]   # global stacked-table rows
        B = idx.shape[0]
        B_pad = _round_up(max(B, 1), SUBLANE)
        idx = jnp.pad(idx, ((0, B_pad - B), (0, idx_lanes - n_tok)),
                      constant_values=-1)                        # -1 never matches iota
        out_pad = mlp_social_pallas(idx, slab, layout)
        return out_pad[:B, :out_dim]

    return fwd


# ---- parameter init (deterministic, mirrors the module's __init__) ---------
def init_mlp_params(key, in_dim, hidden_dims, output_dim):
    weights, biases = [], []
    prev = in_dim
    dims = list(hidden_dims) + [output_dim]
    for i, d in enumerate(dims):
        key, kw, kb = jax.random.split(key, 3)
        if i < len(hidden_dims):
            std = (2.0 / prev) ** 0.5              # kaiming_normal_(fan_in, relu)
            w = jax.random.normal(kw, (prev, d), jnp.float32) * std
        else:
            bound = 1.0 / (prev ** 0.5)
            w = jax.random.uniform(kw, (prev, d), jnp.float32, -bound, bound)
        bound = 1.0 / (prev ** 0.5)
        b = jax.random.uniform(kb, (1, d), jnp.float32, -bound, bound)
        weights.append(w)
        biases.append(b)
        prev = d
    return weights, biases


# ---- pure-JAX f32 reference for correctness ---------------------------------
def reference_forward(user_inputs, subreddit_inputs, user_table, subreddit_table,
                      weights, biases):
    B = user_inputs.shape[1]
    u = jnp.take(user_table, user_inputs, axis=0)               # (Lu, B, D)
    u = jnp.transpose(u, (1, 0, 2)).reshape(B, -1)
    s = jnp.take(subreddit_table, subreddit_inputs, axis=0)     # (Ls, B, D)
    s = jnp.transpose(s, (1, 0, 2)).reshape(B, -1)
    h = jnp.concatenate([u, s], axis=1)
    n = len(weights)
    for i, (w, b) in enumerate(zip(weights, biases)):
        h = jnp.dot(h, w, precision=jax.lax.Precision.HIGHEST) + b
        if i < n - 1:
            h = jnp.maximum(h, 0.0)
    return h


if __name__ == "__main__":
    key = jax.random.PRNGKey(0)
    ks = iter(jax.random.split(key, 16))

    B = 8            # batch
    Lu, Ls = 1, 2    # one user token + two subreddit tokens -> 3 * WORD_EMBED_DIM
    SEQ = 16
    hidden_dims = [64, 32]
    output_dim = 8
    in_dim = WORD_EMBED_DIM * 3                 # prepend_social=True

    # Embedding tables: last row is the zero pad embedding (as in the module).
    user_table = jax.random.normal(next(ks), (NUM_USERS + 1, WORD_EMBED_DIM), jnp.float32)
    user_table = user_table.at[-1].set(0.0)
    subreddit_table = jax.random.normal(next(ks), (NUM_SUBREDDITS + 1, WORD_EMBED_DIM), jnp.float32)
    subreddit_table = subreddit_table.at[-1].set(0.0)

    weights, biases = init_mlp_params(next(ks), in_dim, hidden_dims, output_dim)
    slab, layout = pack_mlp_params(user_table, subreddit_table, weights, biases,
                                   n_user_tok=Lu, n_sub_tok=Ls)
    fwd = make_forward(slab, layout)

    # ---- small-batch path (no grid, whole-array VMEM) ----
    text_inputs = jax.random.randint(next(ks), (SEQ, B), 0, 50, dtype=jnp.int32)
    user_inputs = jax.random.randint(next(ks), (Lu, B), 0, NUM_USERS, dtype=jnp.int32)
    subreddit_inputs = jax.random.randint(next(ks), (Ls, B), 0, NUM_SUBREDDITS, dtype=jnp.int32)
    metafeats = jnp.zeros((B, 4), jnp.float32)
    lengths = jnp.full((B,), SEQ, jnp.int32)

    out = jax.block_until_ready(
        fwd(text_inputs, user_inputs, subreddit_inputs, metafeats, lengths))
    assert out.shape == (B, output_dim) and out.dtype == jnp.float32
    ref = reference_forward(user_inputs, subreddit_inputs, user_table, subreddit_table,
                            weights, biases)
    # Tolerance accounts for bf16 parameter storage (f32 accumulation in-kernel).
    np.testing.assert_allclose(np.asarray(out), np.asarray(ref), atol=2e-2, rtol=2e-2)

    # ---- large-batch path (batch grid axis, "parallel" semantics) ----
    BB = 1024
    text_b = jax.random.randint(next(ks), (SEQ, BB), 0, 50, dtype=jnp.int32)
    user_b = jax.random.randint(next(ks), (Lu, BB), 0, NUM_USERS, dtype=jnp.int32)
    sub_b = jax.random.randint(next(ks), (Ls, BB), 0, NUM_SUBREDDITS, dtype=jnp.int32)
    meta_b = jnp.zeros((BB, 4), jnp.float32)
    len_b = jnp.full((BB,), SEQ, jnp.int32)

    out_b = jax.block_until_ready(fwd(text_b, user_b, sub_b, meta_b, len_b))
    assert out_b.shape == (BB, output_dim) and out_b.dtype == jnp.float32
    ref_b = reference_forward(user_b, sub_b, user_table, subreddit_table, weights, biases)
    np.testing.assert_allclose(np.asarray(out_b), np.asarray(ref_b), atol=2e-2, rtol=2e-2)

    print("KERNEL_OK")
</pallas_src>

<mosaic_0001>
module attributes {stable_mosaic.version = 11 : i64} {
  func.func @mlp_social_kernel(%arg0: memref<8x128xi32, #tpu.memory_space<vmem>>, %arg1: memref<464x128xbf16, #tpu.memory_space<vmem>>, %arg2: memref<8x128xf32, #tpu.memory_space<vmem>>) attributes {dimension_semantics = [], scalar_prefetch = 0 : i64, scratch_operands = 0 : i64, tpu.core_type = #tpu.core_type<tc>} {
    %c0 = arith.constant 0 : index
    %c0_0 = arith.constant 0 : index
    %0 = vector.load %arg0[%c0, %c0_0] : memref<8x128xi32, #tpu.memory_space<vmem>>, vector<8x128xi32>
    %1 = tpu.iota {dimensions = array<i32: 1>} : vector<8x56xi32>
    %2 = vector.extract_strided_slice %0 {offsets = [0, 0], sizes = [8, 1], strides = [1, 1]} : vector<8x128xi32> to vector<8x1xi32>
    %3 = vector.broadcast %2 : vector<8x1xi32> to vector<8x56xi32>
    %4 = arith.cmpi eq, %1, %3 : vector<8x56xi32>
    %5 = arith.extui %4 : vector<8x56xi1> to vector<8x56xi32>
    %6 = arith.sitofp %5 : vector<8x56xi32> to vector<8x56xf32>
    %7 = vector.extract_strided_slice %0 {offsets = [0, 1], sizes = [8, 1], strides = [1, 1]} : vector<8x128xi32> to vector<8x1xi32>
    %8 = vector.broadcast %7 : vector<8x1xi32> to vector<8x56xi32>
    %9 = arith.cmpi eq, %1, %8 : vector<8x56xi32>
    %10 = arith.extui %9 : vector<8x56xi1> to vector<8x56xi32>
    %11 = arith.sitofp %10 : vector<8x56xi32> to vector<8x56xf32>
    %12 = arith.addf %6, %11 : vector<8x56xf32>
    %13 = vector.extract_strided_slice %0 {offsets = [0, 2], sizes = [8, 1], strides = [1, 1]} : vector<8x128xi32> to vector<8x1xi32>
    %14 = vector.broadcast %13 : vector<8x1xi32> to vector<8x56xi32>
    %15 = arith.cmpi eq, %1, %14 : vector<8x56xi32>
    %16 = arith.extui %15 : vector<8x56xi1> to vector<8x56xi32>
    %17 = arith.sitofp %16 : vector<8x56xi32> to vector<8x56xf32>
    %18 = arith.addf %12, %17 : vector<8x56xf32>
    %c0_1 = arith.constant 0 : index
    %c0_2 = arith.constant 0 : index
    %19 = vector.load %arg1[%c0_1, %c0_2] : memref<464x128xbf16, #tpu.memory_space<vmem>>, vector<56x128xbf16>
    %20 = arith.truncf %18 : vector<8x56xf32> to vector<8x56xbf16>
    %cst = arith.constant dense<0.000000e+00> : vector<8x128xf32>
    %21 = tpu.matmul %20, %19, %cst {dimension_numbers = #tpu.dot_dimension_numbers<[1], [0], [0], [1], [0, 0, 1, 1], [], []>} : vector<8x56xbf16>, vector<56x128xbf16>, vector<8x128xf32> -> vector<8x128xf32>
    %c56 = arith.constant 56 : index
    %c0_3 = arith.constant 0 : index
    %22 = vector.load %arg1[%c56, %c0_3] : memref<464x128xbf16, #tpu.memory_space<vmem>>, vector<128x128xbf16>
    %c440 = arith.constant 440 : index
    %c0_4 = arith.constant 0 : index
    %23 = vector.load %arg1[%c440, %c0_4] : memref<464x128xbf16, #tpu.memory_space<vmem>>, vector<1x128xbf16>
    %24 = arith.extf %23 : vector<1x128xbf16> to vector<1x128xf32>
    %25 = arith.truncf %21 : vector<8x128xf32> to vector<8x128xbf16>
    %cst_5 = arith.constant dense<0.000000e+00> : vector<8x128xf32>
    %26 = tpu.matmul %25, %22, %cst_5 {dimension_numbers = #tpu.dot_dimension_numbers<[1], [0], [0], [1], [0, 0, 1, 1], [], []>} : vector<8x128xbf16>, vector<128x128xbf16>, vector<8x128xf32> -> vector<8x128xf32>
    %27 = vector.broadcast %24 : vector<1x128xf32> to vector<8x128xf32>
    %28 = arith.addf %26, %27 : vector<8x128xf32>
    %cst_6 = arith.constant 0.000000e+00 : f32
    %29 = vector.broadcast %cst_6 : f32 to vector<8x128xf32>
    %30 = arith.maximumf %28, %29 : vector<8x128xf32>
    %c184 = arith.constant 184 : index
    %c0_7 = arith.constant 0 : index
    %31 = vector.load %arg1[%c184, %c0_7] : memref<464x128xbf16, #tpu.memory_space<vmem>>, vector<128x128xbf16>
    %c448 = arith.constant 448 : index
    %c0_8 = arith.constant 0 : index
    %32 = vector.load %arg1[%c448, %c0_8] : memref<464x128xbf16, #tpu.memory_space<vmem>>, vector<1x128xbf16>
    %33 = arith.extf %32 : vector<1x128xbf16> to vector<1x128xf32>
    %34 = arith.truncf %30 : vector<8x128xf32> to vector<8x128xbf16>
    %cst_9 = arith.constant dense<0.000000e+00> : vector<8x128xf32>
    %35 = tpu.matmul %34, %31, %cst_9 {dimension_numbers = #tpu.dot_dimension_numbers<[1], [0], [0], [1], [0, 0, 1, 1], [], []>} : vector<8x128xbf16>, vector<128x128xbf16>, vector<8x128xf32> -> vector<8x128xf32>
    %36 = vector.broadcast %33 : vector<1x128xf32> to vector<8x128xf32>
    %37 = arith.addf %35, %36 : vector<8x128xf32>
    %cst_10 = arith.constant 0.000000e+00 : f32
    %38 = vector.broadcast %cst_10 : f32 to vector<8x128xf32>
    %39 = arith.maximumf %37, %38 : vector<8x128xf32>
    %c312 = arith.constant 312 : index
    %c0_11 = arith.constant 0 : index
    %40 = vector.load %arg1[%c312, %c0_11] : memref<464x128xbf16, #tpu.memory_space<vmem>>, vector<128x128xbf16>
    %c456 = arith.constant 456 : index
    %c0_12 = arith.constant 0 : index
    %41 = vector.load %arg1[%c456, %c0_12] : memref<464x128xbf16, #tpu.memory_space<vmem>>, vector<1x128xbf16>
    %42 = arith.extf %41 : vector<1x128xbf16> to vector<1x128xf32>
    %43 = arith.truncf %39 : vector<8x128xf32> to vector<8x128xbf16>
    %cst_13 = arith.constant dense<0.000000e+00> : vector<8x128xf32>
    %44 = tpu.matmul %43, %40, %cst_13 {dimension_numbers = #tpu.dot_dimension_numbers<[1], [0], [0], [1], [0, 0, 1, 1], [], []>} : vector<8x128xbf16>, vector<128x128xbf16>, vector<8x128xf32> -> vector<8x128xf32>
    %45 = vector.broadcast %42 : vector<1x128xf32> to vector<8x128xf32>
    %46 = arith.addf %44, %45 : vector<8x128xf32>
    %c0_14 = arith.constant 0 : index
    %c0_15 = arith.constant 0 : index
    %47 = vector.load %arg2[%c0_14, %c0_15] : memref<8x128xf32, #tpu.memory_space<vmem>>, vector<8x128xf32>
    tpu.vector_store %arg2[%c0_14, %c0_15], %46 {strides = array<i32>} : memref<8x128xf32, #tpu.memory_space<vmem>>, vector<8x128xf32>,
    return
  }
}

</mosaic_0001>

<llo_original>
// kernel: fwd.1
$region0: #{fwd.1}
  #allocation0 [shape = 'u32[]', space=smem, size = 0x4, offset = 0x4, fixed_abs, tag = 'smem constant byte address 0x4 - core index']
  #allocation1 [shape = 'u32[72,128]{1,0:T(1,128)}', space=vmem, size = 0x9000, scoped, tag = 'internal scratch']
  %s0 = inlined_call_operand.vmem [shape: s32[8,128], index: 0, kind: input, shape index: {}]
  %s1 = inlined_call_operand.hbm [shape: bf16[464,128], index: 1, kind: input, shape index: {}]
  %s2 = inlined_call_operand.hbm [shape: f32[8,128], index: 2, kind: output, shape index: {}]
  %s3 = sld [smem:[#allocation0]]
  $region22: #{fwd.1} parent=0
    _
  %s5 = ssub.s32 1, %s3
  %s6 = scalar_select 0, %s5, %s3
  $region1: #{fwd.1} parent=0
    #allocation2 [shape = 'u8[118784]{0}', space=vmem, size = 0x1d000, scoped, tag = 'input window, operand 1, single buffered']
    #allocation3 [shape = 's32[1]{0}', space=sflag, size = 0x4, scoped, tag = 'scoped memory for fwd.1']
    #allocation4 [shape = 's32[1]{0}', space=sflag, size = 0x4, scoped, tag = 'scoped memory for fwd.1']
    #allocation5 [shape = 'u8[4096]{0}', space=vmem, size = 0x1000, scoped, tag = 'output window, operand 0, single buffered']
    %7 = vsyncpa [#allocation3], 0
    %8 = vsyncpa [#allocation4], 0
    // Predicated region
    $region2: #{fwd.1} parent=1 // pred_check
      _
    $region3: #{fwd.1} parent=1 // pred_check_branch
      %10 = sbr.rel (0) target = $region5
    $region4: #{fwd.1} parent=1 // pred_region
      _
    $region5: #{fwd.1} parent=1 // pred_fallthru
      _
    // Predicated region
    $region6: #{fwd.1} parent=1 // pred_check
      _
    $region7: #{fwd.1} parent=1 // pred_check_branch
      %12 = sbr.rel (0) target = $region9
    $region8: #{fwd.1} parent=1 // pred_region
      %14 = vsyncadd [#allocation3], 0
      %s15 = sshll.u32 %s1, 4
      %s16 = int_to_ptr.hbm [resolvable:$true] %s15
      %s17 = sshll.u32 [#allocation2], 4
      %s18 = int_to_ptr.vmem [resolvable:$true] %s17
      %23 = dma.hbm_to_vmem [thread:$0]  %s16, 3712, %s18, [#allocation3], 64, 64, 4
    $region9: #{fwd.1} parent=1 // pred_fallthru
      _
    // Predicated region
    $region10: #{fwd.1} parent=1 // pred_check
      _
    $region11: #{fwd.1} parent=1 // pred_check_branch
      %25 = sbr.rel (0) target = $region13
    $region12: #{fwd.1} parent=1 // pred_region
      %27 = dma.done [#allocation3], 3712
    $region13: #{fwd.1} parent=1 // pred_fallthru
      _
    %v29 = vld [vmem:[%s0] sm:$0xff]
    %v30 = vlaneseq
    %v31 = vand.u32 %v30, 127
    %32 = vset.pattern.permute.xlu0 0
    %33 = vperm.xlu0 %32, %v29
    %v34 = vpop.permute.xlu0 %33
    %vm35 = vcmp.eq.s32.totalorder %v31, %v34
    %v36 = vsel %vm35, 1, 0
    %v37 = vcvt.s32.f32 %v36
    %38 = vset.pattern.permute.xlu0 1
    %39 = vperm.xlu0 %38, %v29
    %v40 = vpop.permute.xlu0 %39
    %vm41 = vcmp.eq.s32.totalorder %v31, %v40
    %v42 = vsel %vm41, 1, 0
    %v43 = vcvt.s32.f32 %v42
    %v44 = vadd.f32 %v37, %v43
    %45 = vset.pattern.permute.xlu0 2
    %46 = vperm.xlu0 %45, %v29
    %v47 = vpop.permute.xlu0 %46
    %vm48 = vcmp.eq.s32.totalorder %v31, %v47
    %v49 = vsel %vm48, 1, 0
    %v50 = vcvt.s32.f32 %v49
    %v51 = vadd.f32 %v44, %v50
    %v52 = vld [vmem:[#allocation2] sm:$0xf]
    %v53 = vld [vmem:[#allocation2 + $0x4] sm:$0xf]
    %v54 = vld [vmem:[#allocation2 + $0x8] sm:$0xf]
    %v55 = vld [vmem:[#allocation2 + $0xc] sm:$0xf]
    %v56 = vld [vmem:[#allocation2 + $0x10] sm:$0xf]
    %v57 = vld [vmem:[#allocation2 + $0x14] sm:$0xf]
    %v58 = vld [vmem:[#allocation2 + $0x18] sm:$0xf]
    %v59 = vpack.c.bf16 %v51, %v51
    %v67 = vunpack.c.l.b16 %v52
    %v68 = vunpack.c.l.b16 %v53
    %v69 = vunpack.c.l.b16 %v54
    %v70 = vunpack.c.l.b16 %v55
    %v71 = vunpack.c.l.b16 %v56
    %v72 = vunpack.c.l.b16 %v57
    %v73 = vunpack.c.l.b16 %v58
    %v74 = vpack.c.b16 %v68, %v67
    %v75 = vpack.c.b16 %v70, %v69
    %v76 = vpack.c.b16 %v72, %v71
    %v77 = vpack.c.b16 %v73, %v73
    %vm81 = vcmask 457728
    %v83 = vsel %vm81, %v59, 0
    %vm85 = vcmask 1043456
    %v87 = vsel %vm85, %v77, 0
    %89 = vmatpush.bf16.msra.mxu0 0
    %90 = vmatpush.bf16.msra.mxu0 0
    %91 = vmatpush.bf16.msra.mxu0 0
    %92 = vmatpush.bf16.msra.mxu0 0
    %93 = vmatpush.bf16.msra.mxu0 %v87
    %94 = vmatpush.bf16.msra.mxu0 %v76
    %95 = vmatpush.bf16.msra.mxu0 %v75
    %96 = vmatpush.bf16.msra.mxu0 %v74
    %97 = vmatmul.bf16.gmra.mxu0 %v83
    %v98 = vpop.f32.mrf.mxu0
    %v99 = vadd.f32 0.0, %v98
    %v100 = vpop.f32.mrf.mxu0
    %101 = vdwg.mxu0
    %v102 = vld [vmem:[#allocation2 + $0x1c] sm:$0xf]
    %v103 = vld [vmem:[#allocation2 + $0x20] sm:$0xf]
    %v104 = vld [vmem:[#allocation2 + $0x24] sm:$0xf]
    %v105 = vld [vmem:[#allocation2 + $0x28] sm:$0xf]
    %v106 = vld [vmem:[#allocation2 + $0x2c] sm:$0xf]
    %v107 = vld [vmem:[#allocation2 + $0x30] sm:$0xf]
    %v108 = vld [vmem:[#allocation2 + $0x34] sm:$0xf]
    %v109 = vld [vmem:[#allocation2 + $0x38] sm:$0xf]
    %v110 = vld [vmem:[#allocation2 + $0x3c] sm:$0xf]
    %v111 = vld [vmem:[#allocation2 + $0x40] sm:$0xf]
    %v112 = vld [vmem:[#allocation2 + $0x44] sm:$0xf]
    %v113 = vld [vmem:[#allocation2 + $0x48] sm:$0xf]
    %v114 = vld [vmem:[#allocation2 + $0x4c] sm:$0xf]
    %v115 = vld [vmem:[#allocation2 + $0x50] sm:$0xf]
    %v116 = vld [vmem:[#allocation2 + $0x54] sm:$0xf]
    %v117 = vld [vmem:[#allocation2 + $0x58] sm:$0xf]
    %v118 = vld [vmem:[#allocation2 + $0xdc] sm:$0x1]
    %v119 = vunpack.c.l.bf16 %v118
    %v120 = vpack.c.bf16 %v99, %v99
    %v121 = vperm.slane %v119, 0
    %v138 = vunpack.c.l.b16 %v102
    %v139 = vunpack.c.l.b16 %v103
    %v140 = vunpack.c.l.b16 %v104
    %v141 = vunpack.c.l.b16 %v105
    %v142 = vunpack.c.l.b16 %v106
    %v143 = vunpack.c.l.b16 %v107
    %v144 = vunpack.c.l.b16 %v108
    %v145 = vunpack.c.l.b16 %v109
    %v146 = vunpack.c.l.b16 %v110
    %v147 = vunpack.c.l.b16 %v111
    %v148 = vunpack.c.l.b16 %v112
    %v149 = vunpack.c.l.b16 %v113
    %v150 = vunpack.c.l.b16 %v114
    %v151 = vunpack.c.l.b16 %v115
    %v152 = vunpack.c.l.b16 %v116
    %v153 = vunpack.c.l.b16 %v117
    %v154 = vpack.c.b16 %v139, %v138
    %v155 = vpack.c.b16 %v141, %v140
    %v156 = vpack.c.b16 %v143, %v142
    %v157 = vpack.c.b16 %v145, %v144
    %v158 = vpack.c.b16 %v147, %v146
    %v159 = vpack.c.b16 %v149, %v148
    %v160 = vpack.c.b16 %v151, %v150
    %v161 = vpack.c.b16 %v153, %v152
    %170 = vmatpush.bf16.msra.mxu0 %v161
    %171 = vmatpush.bf16.msra.mxu0 %v160
    %172 = vmatpush.bf16.msra.mxu0 %v159
    %173 = vmatpush.bf16.msra.mxu0 %v158
    %174 = vmatpush.bf16.msra.mxu0 %v157
    %175 = vmatpush.bf16.msra.mxu0 %v156
    %176 = vmatpush.bf16.msra.mxu0 %v155
    %177 = vmatpush.bf16.msra.mxu0 %v154
    %178 = vmatmul.bf16.gmra.mxu0 %v120
    %v179 = vpop.f32.mrf.mxu0
    %v180 = vadd.f32 %v121, %v179
    %v181 = vpop.f32.mrf.mxu0
    %182 = vdwg.mxu0
    %v183 = vmax.f32 %v180, 0.0
    %v184 = vld [vmem:[#allocation2 + $0x5c] sm:$0xf]
    %v185 = vld [vmem:[#allocation2 + $0x60] sm:$0xf]
    %v186 = vld [vmem:[#allocation2 + $0x64] sm:$0xf]
    %v187 = vld [vmem:[#allocation2 + $0x68] sm:$0xf]
    %v188 = vld [vmem:[#allocation2 + $0x6c] sm:$0xf]
    %v189 = vld [vmem:[#allocation2 + $0x70] sm:$0xf]
    %v190 = vld [vmem:[#allocation2 + $0x74] sm:$0xf]
    %v191 = vld [vmem:[#allocation2 + $0x78] sm:$0xf]
    %v192 = vld [vmem:[#allocation2 + $0x7c] sm:$0xf]
    %v193 = vld [vmem:[#allocation2 + $0x80] sm:$0xf]
    %v194 = vld [vmem:[#allocation2 + $0x84] sm:$0xf]
    %v195 = vld [vmem:[#allocation2 + $0x88] sm:$0xf]
    %v196 = vld [vmem:[#allocation2 + $0x8c] sm:$0xf]
    %v197 = vld [vmem:[#allocation2 + $0x90] sm:$0xf]
    %v198 = vld [vmem:[#allocation2 + $0x94] sm:$0xf]
    %v199 = vld [vmem:[#allocation2 + $0x98] sm:$0xf]
    %v200 = vld [vmem:[#allocation2 + $0xe0] sm:$0x1]
    %v201 = vunpack.c.l.bf16 %v200
    %v202 = vpack.c.bf16 %v183, %v183
    %v203 = vperm.slane %v201, 0
    %v220 = vunpack.c.l.b16 %v184
    %v221 = vunpack.c.l.b16 %v185
    %v222 = vunpack.c.l.b16 %v186
    %v223 = vunpack.c.l.b16 %v187
    %v224 = vunpack.c.l.b16 %v188
    %v225 = vunpack.c.l.b16 %v189
    %v226 = vunpack.c.l.b16 %v190
    %v227 = vunpack.c.l.b16 %v191
    %v228 = vunpack.c.l.b16 %v192
    %v229 = vunpack.c.l.b16 %v193
    %v230 = vunpack.c.l.b16 %v194
    %v231 = vunpack.c.l.b16 %v195
    %v232 = vunpack.c.l.b16 %v196
    %v233 = vunpack.c.l.b16 %v197
    %v234 = vunpack.c.l.b16 %v198
    %v235 = vunpack.c.l.b16 %v199
    %v236 = vpack.c.b16 %v221, %v220
    %v237 = vpack.c.b16 %v223, %v222
    %v238 = vpack.c.b16 %v225, %v224
    %v239 = vpack.c.b16 %v227, %v226
    %v240 = vpack.c.b16 %v229, %v228
    %v241 = vpack.c.b16 %v231, %v230
    %v242 = vpack.c.b16 %v233, %v232
    %v243 = vpack.c.b16 %v235, %v234
    %252 = vmatpush.bf16.msra.mxu0 %v243
    %253 = vmatpush.bf16.msra.mxu0 %v242
    %254 = vmatpush.bf16.msra.mxu0 %v241
    %255 = vmatpush.bf16.msra.mxu0 %v240
    %256 = vmatpush.bf16.msra.mxu0 %v239
    %257 = vmatpush.bf16.msra.mxu0 %v238
    %258 = vmatpush.bf16.msra.mxu0 %v237
    %259 = vmatpush.bf16.msra.mxu0 %v236
    %260 = vmatmul.bf16.gmra.mxu0 %v202
    %v261 = vpop.f32.mrf.mxu0
    %v262 = vadd.f32 %v203, %v261
    %v263 = vpop.f32.mrf.mxu0
    %264 = vdwg.mxu0
    %v265 = vmax.f32 %v262, 0.0
    %v266 = vld [vmem:[#allocation2 + $0x9c] sm:$0xf]
    %v267 = vld [vmem:[#allocation2 + $0xa0] sm:$0xf]
    %v268 = vld [vmem:[#allocation2 + $0xa4] sm:$0xf]
    %v269 = vld [vmem:[#allocation2 + $0xa8] sm:$0xf]
    %v270 = vld [vmem:[#allocation2 + $0xac] sm:$0xf]
    %v271 = vld [vmem:[#allocation2 + $0xb0] sm:$0xf]
    %v272 = vld [vmem:[#allocation2 + $0xb4] sm:$0xf]
    %v273 = vld [vmem:[#allocation2 + $0xb8] sm:$0xf]
    %v274 = vld [vmem:[#allocation2 + $0xbc] sm:$0xf]
    %v275 = vld [vmem:[#allocation2 + $0xc0] sm:$0xf]
    %v276 = vld [vmem:[#allocation2 + $0xc4] sm:$0xf]
    %v277 = vld [vmem:[#allocation2 + $0xc8] sm:$0xf]
    %v278 = vld [vmem:[#allocation2 + $0xcc] sm:$0xf]
    %v279 = vld [vmem:[#allocation2 + $0xd0] sm:$0xf]
    %v280 = vld [vmem:[#allocation2 + $0xd4] sm:$0xf]
    %v281 = vld [vmem:[#allocation2 + $0xd8] sm:$0xf]
    %v282 = vld [vmem:[#allocation2 + $0xe4] sm:$0x1]
    %v283 = vunpack.c.l.bf16 %v282
    %v284 = vpack.c.bf16 %v265, %v265
    %v285 = vperm.slane %v283, 0
    %v302 = vunpack.c.l.b16 %v266
    %v303 = vunpack.c.l.b16 %v267
    %v304 = vunpack.c.l.b16 %v268
    %v305 = vunpack.c.l.b16 %v269
    %v306 = vunpack.c.l.b16 %v270
    %v307 = vunpack.c.l.b16 %v271
    %v308 = vunpack.c.l.b16 %v272
    %v309 = vunpack.c.l.b16 %v273
    %v310 = vunpack.c.l.b16 %v274
    %v311 = vunpack.c.l.b16 %v275
    %v312 = vunpack.c.l.b16 %v276
    %v313 = vunpack.c.l.b16 %v277
    %v314 = vunpack.c.l.b16 %v278
    %v315 = vunpack.c.l.b16 %v279
    %v316 = vunpack.c.l.b16 %v280
    %v317 = vunpack.c.l.b16 %v281
    %v318 = vpack.c.b16 %v303, %v302
    %v319 = vpack.c.b16 %v305, %v304
    %v320 = vpack.c.b16 %v307, %v306
    %v321 = vpack.c.b16 %v309, %v308
    %v322 = vpack.c.b16 %v311, %v310
    %v323 = vpack.c.b16 %v313, %v312
    %v324 = vpack.c.b16 %v315, %v314
    %v325 = vpack.c.b16 %v317, %v316
    %334 = vmatpush.bf16.msra.mxu0 %v325
    %335 = vmatpush.bf16.msra.mxu0 %v324
    %336 = vmatpush.bf16.msra.mxu0 %v323
    %337 = vmatpush.bf16.msra.mxu0 %v322
    %338 = vmatpush.bf16.msra.mxu0 %v321
    %339 = vmatpush.bf16.msra.mxu0 %v320
    %340 = vmatpush.bf16.msra.mxu0 %v319
    %341 = vmatpush.bf16.msra.mxu0 %v318
    %342 = vmatmul.bf16.gmra.mxu0 %v284
    %v343 = vpop.f32.mrf.mxu0
    %v344 = vadd.f32 %v285, %v343
    %v345 = vpop.f32.mrf.mxu0
    %346 = vdwg.mxu0
    %347 = vst [vmem:[#allocation5] sm:$0xff] %v344
    // Predicated region
    $region14: #{fwd.1} parent=1 // pred_check
      _
    $region15: #{fwd.1} parent=1 // pred_check_branch
      %349 = sbr.rel (0) target = $region17
    $region16: #{fwd.1} parent=1 // pred_region
      %351 = vsyncadd [#allocation4], 0
      %s353 = sshll.u32 [#allocation5], 4
      %s354 = int_to_ptr.vmem [resolvable:$true] %s353
      %s355 = sshll.u32 %s2, 4
      %s356 = int_to_ptr.hbm [resolvable:$true] %s355
      %358 = dma.vmem_to_hbm [thread:$0]  %s354, 128, %s356, [#allocation4]
    $region17: #{fwd.1} parent=1 // pred_fallthru
      _
    // Predicated region
    $region18: #{fwd.1} parent=1 // pred_check
      _
    $region19: #{fwd.1} parent=1 // pred_check_branch
      %360 = sbr.rel (0) target = $region21
    $region20: #{fwd.1} parent=1 // pred_region
      %362 = dma.done [#allocation4], 128
    $region21: #{fwd.1} parent=1 // pred_fallthru
      _
    %363 = vsyncpa [#allocation3], 1
    %364 = vsyncpa [#allocation4], 1

</llo_original>
